<compile_context>
chip_gen: v7x
topology: tpu7x:2x2x1
jax: 0.10.0
libtpu: 0.0.40
codegen_flags: <defaults>
</compile_context>

<pallas_src>
import math

import jax
import jax.numpy as jnp
import numpy as np
from jax.experimental import pallas as pl
from jax.experimental.pallas import tpu as pltpu

_BIG = 1e30  # additive mask penalty: << f32 max, >> any real message


# ---------------------------------------------------------------------------
# Kernel 1: h_pool_t = relu(W_pool^T @ feat^T + b_pool^T)  -- emitted (F_in, N)
# so kernel 2 can consume source-on-lane slabs without any relayout.
# ---------------------------------------------------------------------------
def _pool_t_kernel(feat_t_ref, wp_t_ref, bp_t_ref, out_ref):
  h = jnp.dot(wp_t_ref[...], feat_t_ref[...],
              preferred_element_type=jnp.float32)
  out_ref[...] = jnp.maximum(h + bp_t_ref[...], 0.0)


# ---------------------------------------------------------------------------
# Kernel 2: per (dst tile, src chunk) -- masked max-aggregation with a running
# VMEM accumulator; fused fc_self + fc_neigh projection at the last chunk.
# ---------------------------------------------------------------------------
def _sage_agg_kernel(feat_dst_ref, hpt_ref, w_ref, bias_ref, zdeg_ref,
                     w_self_ref, w_neigh_ref, b_ref, out_ref,
                     acc_ref, bias_f32_ref):
  j = pl.program_id(1)

  @pl.when(j == 0)
  def _init():
    acc_ref[...] = jnp.full(acc_ref.shape, -_BIG, jnp.float32)

  # Convert the bf16 mask-bias block to f32 once per block (VMEM staging),
  # so the hot loop below stays at 2 VALU ops / element.
  bias_f32_ref[...] = bias_ref[...].astype(jnp.float32)

  f_in = acc_ref.shape[1]
  # Static feature loop: per feature f, a lane-dense (TV, TU) slab
  #   cand[v,u] = w[v,u] * h_pool_t[f,u] + bias[v,u]
  # (mul + add on VPU), then a lane max-reduce (XLU) and a static single-lane
  # column RMW against the running-max accumulator.
  # TODO(synk): for very large F_in (>~512) block this static loop to bound
  # generated code size / compile time.
  for f in range(f_in):
    h_row = hpt_ref[f:f + 1, :]                          # (1, TU), sublane bcast
    cand = w_ref[...] * h_row + bias_f32_ref[...]        # (TV, TU)
    col = jnp.max(cand, axis=-1, keepdims=True)          # (TV, 1) lane reduce
    acc_ref[:, f:f + 1] = jnp.maximum(acc_ref[:, f:f + 1], col)

  @pl.when(j == pl.num_programs(1) - 1)
  def _finalize():
    # Zero-in-degree destinations get 0 (DGL's fill value for max reduce).
    neigh = jnp.where(zdeg_ref[...] > 0.0, 0.0, acc_ref[...])
    # Two MXU dots (no lane concatenate since F_in may not be 128-aligned).
    rst = jnp.dot(feat_dst_ref[...], w_self_ref[...],
                  preferred_element_type=jnp.float32)
    rst = rst + jnp.dot(neigh, w_neigh_ref[...],
                        preferred_element_type=jnp.float32)
    out_ref[...] = (rst + b_ref[...]).astype(out_ref.dtype)


# ---------------------------------------------------------------------------
# Wrapper
# ---------------------------------------------------------------------------
def _pick_tile(n, max_tile):
  if n <= max_tile:
    return n
  for t in (max_tile, 2048, 1024, 512, 256, 128, 64, 32, 16, 8):
    if t <= max_tile and n % t == 0:
      return t
  # TODO(synk): pad ragged last tiles instead of requiring divisibility.
  raise ValueError(f"N={n} larger than {max_tile} must be divisible by 8")


def _vmem_cap_bytes():
  try:
    kind = jax.devices()[0].device_kind.lower()
  except Exception:  # pragma: no cover - defensive
    kind = ""
  if "v5" in kind or "v6" in kind:
    return 100 << 20   # 128 MiB physical VMEM: allow big tiles
  return 48 << 20      # v7x (and unknown): 64 MiB/TC physical, leave headroom


def sage_pool_layer(feat, w, mask, params, *, tile_v=None, tile_u=None):
  """SAGEConv 'pool' layer with per-edge weights.

  feat: (N, F_in) node features (src == dst graph).
  w:    (N, N) dense edge weights, w[v, u] = weight of edge u -> v.
  mask: (N, N) dense adjacency, 1.0 where edge u -> v exists.
  Returns (N, F_out) float32.
  """
  n, f_in = feat.shape
  f_out = params["w_self"].shape[1]
  feat = feat.astype(jnp.float32)
  w = w.astype(jnp.float32)
  mask = mask.astype(jnp.float32)

  # ---- wrapper-side precompute (cheap XLA ops, hoisted out of the kernels) -
  feat_t = feat.T                                   # (F_in, N) for kernel 1
  wp_t = params["w_pool"].T                         # (F_in, F_in)
  bp_t = params["b_pool"].T                         # (F_in, 1)
  # bf16 mask-bias: exactly 0 on edges, ~-1e30 on non-edges (half the bytes
  # of an f32 bias stream).
  neg_bias = ((mask - 1.0) * _BIG).astype(jnp.bfloat16)
  zero_deg = (jnp.sum(mask, axis=1, keepdims=True) == 0).astype(jnp.float32)

  # Lane-dense output: pad F_out up to a multiple of 128 (unmasked stores).
  f_out_p = max(128, ((f_out + 127) // 128) * 128)
  w_self = params["w_self"]
  w_neigh = params["w_neigh"]
  b_sn = params["b_self"] + params["b_neigh"]       # (1, F_out)
  if f_out_p != f_out:
    pad = f_out_p - f_out
    w_self = jnp.pad(w_self, ((0, 0), (0, pad)))
    w_neigh = jnp.pad(w_neigh, ((0, 0), (0, pad)))
    b_sn = jnp.pad(b_sn, ((0, 0), (0, pad)))

  cap = _vmem_cap_bytes()
  big_vmem = cap >= (96 << 20)

  # ---- kernel 1: transposed h_pool computed once over all source nodes -----
  tile_s = _pick_tile(n, 512)
  h_pool_t = pl.pallas_call(
      _pool_t_kernel,
      out_shape=jax.ShapeDtypeStruct((f_in, n), jnp.float32),
      grid_spec=pltpu.PrefetchScalarGridSpec(
          num_scalar_prefetch=0,
          grid=(n // tile_s,),
          in_specs=[
              pl.BlockSpec((f_in, tile_s), lambda i: (0, i)),   # feat^T tile
              pl.BlockSpec((f_in, f_in), lambda i: (0, 0)),     # W_pool^T
              pl.BlockSpec((f_in, 1), lambda i: (0, 0)),        # b_pool^T
          ],
          out_specs=pl.BlockSpec((f_in, tile_s), lambda i: (0, i)),
      ),
      compiler_params=pltpu.CompilerParams(
          dimension_semantics=("parallel",)),
  )(feat_t, wp_t, bp_t)

  # ---- kernel 2: chunked aggregation + fused output projection -------------
  if tile_v is None:
    tile_v = _pick_tile(n, 256 if big_vmem else 128)
  if tile_u is None:
    tile_u = _pick_tile(n, 2048 if big_vmem else 1024)
  assert n % tile_v == 0 and n % tile_u == 0

  # VMEM accounting: double-buffered input/output blocks + single scratches.
  est = 2 * (4 * tile_v * f_in          # feat_dst
             + 4 * f_in * tile_u        # h_pool_t chunk
             + 4 * tile_v * tile_u      # w chunk
             + 2 * tile_v * tile_u      # bf16 bias chunk
             + 4 * tile_v               # zero-degree flag
             + 4 * 2 * f_in * f_out_p   # W_self, W_neigh
             + 4 * f_out_p              # bias
             + 4 * tile_v * f_out_p)    # output tile
  est += 4 * (tile_v * f_in + tile_v * tile_u)   # scratches (single-buffered)
  vmem_limit = int(min(max(2 * est, 32 << 20), cap))

  out = pl.pallas_call(
      _sage_agg_kernel,
      out_shape=jax.ShapeDtypeStruct((n, f_out_p), jnp.float32),
      grid_spec=pltpu.PrefetchScalarGridSpec(
          num_scalar_prefetch=0,
          grid=(n // tile_v, n // tile_u),
          in_specs=[
              pl.BlockSpec((tile_v, f_in), lambda i, j: (i, 0)),    # feat_dst
              pl.BlockSpec((f_in, tile_u), lambda i, j: (0, j)),    # h_pool^T
              pl.BlockSpec((tile_v, tile_u), lambda i, j: (i, j)),  # edge w
              pl.BlockSpec((tile_v, tile_u), lambda i, j: (i, j)),  # bf16 bias
              pl.BlockSpec((tile_v, 1), lambda i, j: (i, 0)),       # zero-deg
              pl.BlockSpec((f_in, f_out_p), lambda i, j: (0, 0)),   # W_self
              pl.BlockSpec((f_in, f_out_p), lambda i, j: (0, 0)),   # W_neigh
              pl.BlockSpec((1, f_out_p), lambda i, j: (0, 0)),      # bias
          ],
          out_specs=pl.BlockSpec((tile_v, f_out_p), lambda i, j: (i, 0)),
          scratch_shapes=[
              pltpu.VMEM((tile_v, f_in), jnp.float32),     # running max acc
              pltpu.VMEM((tile_v, tile_u), jnp.float32),   # f32 bias staging
          ],
      ),
      compiler_params=pltpu.CompilerParams(
          dimension_semantics=("parallel", "arbitrary"),
          vmem_limit_bytes=vmem_limit),
  )(feat, h_pool_t, w, neg_bias, zero_deg, w_self, w_neigh, b_sn)

  return out[:, :f_out] if f_out_p != f_out else out


# ---------------------------------------------------------------------------
# Parameter init (matches the PyTorch module's reset_parameters) + reference.
# ---------------------------------------------------------------------------
def _xavier_uniform(key, fan_in, fan_out, gain):
  bound = gain * math.sqrt(6.0 / (fan_in + fan_out))
  return jax.random.uniform(key, (fan_in, fan_out), jnp.float32, -bound, bound)


def init_params(key, in_feats, out_feats):
  ks = jax.random.split(key, 6)
  gain = math.sqrt(2.0)  # nn.init.calculate_gain('relu')
  return {
      "w_pool": _xavier_uniform(ks[0], in_feats, in_feats, gain),
      "b_pool": jax.random.uniform(ks[1], (1, in_feats), jnp.float32, -0.1, 0.1),
      "w_self": _xavier_uniform(ks[2], in_feats, out_feats, 1.0),
      "b_self": jax.random.uniform(ks[3], (1, out_feats), jnp.float32, -0.1, 0.1),
      "w_neigh": _xavier_uniform(ks[4], in_feats, out_feats, gain),
      "b_neigh": jax.random.uniform(ks[5], (1, out_feats), jnp.float32, -0.1, 0.1),
  }


def reference(feat, w, mask, p):
  h_pool = jnp.maximum(feat @ p["w_pool"] + p["b_pool"], 0.0)
  msg = w[:, :, None] * h_pool[None, :, :]
  msg = jnp.where(mask[:, :, None] > 0, msg, -jnp.inf)
  neigh = jnp.max(msg, axis=1)
  deg = jnp.sum(mask, axis=1, keepdims=True)
  neigh = jnp.where(deg > 0, neigh, 0.0)
  return feat @ p["w_self"] + p["b_self"] + neigh @ p["w_neigh"] + p["b_neigh"]


if __name__ == "__main__":
  N, F_IN, F_OUT = 16, 32, 32
  key = jax.random.PRNGKey(0)
  k_feat, k_w, k_mask, k_params = jax.random.split(key, 4)

  feat = jax.random.normal(k_feat, (N, F_IN), jnp.float32)
  w = jax.random.normal(k_w, (N, N), jnp.float32)          # per-edge weights
  mask = (jax.random.uniform(k_mask, (N, N)) < 0.5).astype(jnp.float32)
  mask = jnp.maximum(mask, jnp.eye(N, dtype=jnp.float32))
  mask = mask.at[0, :].set(0.0)   # node 0 has zero in-degree -> exercises fill
  params = init_params(k_params, F_IN, F_OUT)

  out = jax.block_until_ready(sage_pool_layer(feat, w, mask, params))

  ref = reference(feat, w, mask, params)
  np.testing.assert_allclose(np.asarray(out), np.asarray(ref),
                             rtol=2e-5, atol=2e-5)
  print("KERNEL_OK")
</pallas_src>

<mosaic_0001>
module attributes {stable_mosaic.version = 11 : i64} {
  func.func @_pool_t_kernel(%arg0: i32, %arg1: memref<32x16xf32, #tpu.memory_space<vmem>>, %arg2: memref<32x32xf32, #tpu.memory_space<vmem>>, %arg3: memref<32x1xf32, #tpu.memory_space<vmem>>, %arg4: memref<32x16xf32, #tpu.memory_space<vmem>>) attributes {dimension_semantics = [#tpu.dimension_semantics<parallel>], iteration_bounds = array<i64: 1>, scalar_prefetch = 0 : i64, scratch_operands = 0 : i64, tpu.core_type = #tpu.core_type<tc>, window_params = [{transform_indices = @transform_0, window_bounds = array<i64: 32, 16>}, {pipeline_mode = #tpu.pipeline_mode<synchronous>, transform_indices = @transform_1, window_bounds = array<i64: 32, 32>}, {pipeline_mode = #tpu.pipeline_mode<synchronous>, transform_indices = @transform_2, window_bounds = array<i64: 32, 1>}, {transform_indices = @transform_3, window_bounds = array<i64: 32, 16>}]} {
    %c0 = arith.constant 0 : index
    %c0_0 = arith.constant 0 : index
    %0 = vector.load %arg2[%c0, %c0_0] : memref<32x32xf32, #tpu.memory_space<vmem>>, vector<32x32xf32>
    %c0_1 = arith.constant 0 : index
    %c0_2 = arith.constant 0 : index
    %1 = vector.load %arg1[%c0_1, %c0_2] : memref<32x16xf32, #tpu.memory_space<vmem>>, vector<32x16xf32>
    %cst = arith.constant dense<0.000000e+00> : vector<32x16xf32>
    %2 = tpu.matmul %0, %1, %cst {dimension_numbers = #tpu.dot_dimension_numbers<[1], [0], [0], [1], [0, 0, 1, 1], [], []>} : vector<32x32xf32>, vector<32x16xf32>, vector<32x16xf32> -> vector<32x16xf32>
    %c0_3 = arith.constant 0 : index
    %c0_4 = arith.constant 0 : index
    %3 = vector.load %arg3[%c0_3, %c0_4] : memref<32x1xf32, #tpu.memory_space<vmem>>, vector<32x1xf32>
    %4 = vector.broadcast %3 : vector<32x1xf32> to vector<32x16xf32>
    %5 = arith.addf %2, %4 : vector<32x16xf32>
    %cst_5 = arith.constant 0.000000e+00 : f32
    %6 = vector.broadcast %cst_5 : f32 to vector<32x16xf32>
    %7 = arith.maximumf %5, %6 : vector<32x16xf32>
    %c0_6 = arith.constant 0 : index
    %c0_7 = arith.constant 0 : index
    %8 = vector.load %arg4[%c0_6, %c0_7] : memref<32x16xf32, #tpu.memory_space<vmem>>, vector<32x16xf32>
    tpu.vector_store %arg4[%c0_6, %c0_7], %7 {strides = array<i32>} : memref<32x16xf32, #tpu.memory_space<vmem>>, vector<32x16xf32>,
    return
  }
  func.func @transform_0(%arg0: i32) -> (i32, i32) {
    %c0_i32 = arith.constant 0 : i32
    %c0_i32_0 = arith.constant 0 : i32
    return %c0_i32, %arg0 : i32, i32
  }
  func.func @transform_1(%arg0: i32) -> (i32, i32) {
    %c0_i32 = arith.constant 0 : i32
    %c0_i32_0 = arith.constant 0 : i32
    %c0_i32_1 = arith.constant 0 : i32
    return %c0_i32, %c0_i32_0 : i32, i32
  }
  func.func @transform_2(%arg0: i32) -> (i32, i32) {
    %c0_i32 = arith.constant 0 : i32
    %c0_i32_0 = arith.constant 0 : i32
    %c0_i32_1 = arith.constant 0 : i32
    return %c0_i32, %c0_i32_0 : i32, i32
  }
  func.func @transform_3(%arg0: i32) -> (i32, i32) {
    %c0_i32 = arith.constant 0 : i32
    %c0_i32_0 = arith.constant 0 : i32
    return %c0_i32, %arg0 : i32, i32
  }
}

</mosaic_0001>

<llo_original>
// kernel: tpu_custom_call.1
$region0: #{tpu_custom_call.1}
  #allocation0 [shape = 'u32[]', space=smem, size = 0x4, offset = 0x4, fixed_abs, tag = 'smem constant byte address 0x4 - core index']
  #allocation1 [shape = 'u32[144,128]{1,0:T(1,128)}', space=vmem, size = 0x12000, scoped, tag = 'internal scratch']
  %s0 = inlined_call_operand.vmem [shape: f32[32,16], index: 0, kind: input, shape index: {}]
  %s1 = inlined_call_operand.vmem [shape: f32[32,32], index: 1, kind: input, shape index: {}]
  %s2 = inlined_call_operand.vmem [shape: f32[32,1], index: 2, kind: input, shape index: {}]
  %s3 = inlined_call_operand.vmem [shape: f32[32,16], index: 3, kind: output, shape index: {}]
  %s4 = sld [smem:[#allocation0]]
  $region22: #{tpu_custom_call.1} parent=0
    _
  %s6 = ssub.s32 1, %s4
  %s7 = scalar_select 0, %s6, %s4
  // Predicated region
  $region2: #{tpu_custom_call.1} parent=0 // pred_check
    _
  $region3: #{tpu_custom_call.1} parent=0 // pred_check_branch
    %9 = sbr.rel (0) target = $region5
  $region4: #{tpu_custom_call.1} parent=0 // pred_region
    _
  $region5: #{tpu_custom_call.1} parent=0 // pred_fallthru
    _
  // Predicated region
  $region6: #{tpu_custom_call.1} parent=0 // pred_check
    _
  $region7: #{tpu_custom_call.1} parent=0 // pred_check_branch
    %11 = sbr.rel (0) target = $region9
  $region8: #{tpu_custom_call.1} parent=0 // pred_region
    _
  $region9: #{tpu_custom_call.1} parent=0 // pred_fallthru
    _
  // Predicated region
  $region10: #{tpu_custom_call.1} parent=0 // pred_check
    _
  $region11: #{tpu_custom_call.1} parent=0 // pred_check_branch
    %13 = sbr.rel (0) target = $region13
  $region12: #{tpu_custom_call.1} parent=0 // pred_region
    _
  $region13: #{tpu_custom_call.1} parent=0 // pred_fallthru
    _
  %v14 = vld [vmem:[%s1] sm:$0xff]
  %v15 = vld [vmem:[%s1 + $0x8] sm:$0xff]
  %v16 = vld [vmem:[%s1 + $0x10] sm:$0xff]
  %v17 = vld [vmem:[%s1 + $0x18] sm:$0xff]
  %v18 = vld [vmem:[%s0] sm:$0xff]
  %v19 = vld [vmem:[%s0 + $0x8] sm:$0xff]
  %v20 = vld [vmem:[%s0 + $0x10] sm:$0xff]
  %v21 = vld [vmem:[%s0 + $0x18] sm:$0xff]
  %v22 = vld [vmem:[%s2] sm:$0xff]
  %v23 = vld [vmem:[%s2 + $0x8] sm:$0xff]
  %v24 = vld [vmem:[%s2 + $0x10] sm:$0xff]
  %v25 = vld [vmem:[%s2 + $0x18] sm:$0xff]
  %27 = vset.pattern.permute.xlu0 0
  %28 = vperm.xlu0 %27, %v22
  %v29 = vpop.permute.xlu0 %28
  %32 = vset.pattern.permute.xlu0 0
  %33 = vperm.xlu0 %32, %v23
  %v34 = vpop.permute.xlu0 %33
  %37 = vset.pattern.permute.xlu0 0
  %38 = vperm.xlu0 %37, %v24
  %v39 = vpop.permute.xlu0 %38
  %42 = vset.pattern.permute.xlu0 0
  %43 = vperm.xlu0 %42, %v25
  %v44 = vpop.permute.xlu0 %43
  %vm46 = vcmask 261120
  %v48 = vsel %vm46, %v14, 0
  %v51 = vsel %vm46, %v15, 0
  %v54 = vsel %vm46, %v16, 0
  %v57 = vsel %vm46, %v17, 0
  %59 = vmatprep.subr.mxu0 0.0
  %60 = vmatpush1.msra.mxu0 %v18
  %61 = vmatprep.subr.mxu0 0.0
  %62 = vmatpush1.msra.mxu0 %v19
  %63 = vmatprep.subr.mxu0 0.0
  %64 = vmatpush1.msra.mxu0 %v20
  %65 = vmatprep.subr.mxu0 0.0
  %66 = vmatpush1.msra.mxu0 %v21
  %67 = vmatprep.subr.mxu0 0.0
  %68 = vmatpush1.msra.mxu0 0.0
  %69 = vmatprep.subr.mxu0 0.0
  %70 = vmatpush1.msra.mxu0 0.0
  %71 = vmatprep.subr.mxu0 0.0
  %72 = vmatpush1.msra.mxu0 0.0
  %73 = vmatprep.subr.mxu0 0.0
  %74 = vmatpush1.msra.mxu0 0.0
  %75 = vmatprep.subr.mxu0 0.0
  %76 = vmatpush1.msra.mxu0 0.0
  %77 = vmatprep.subr.mxu0 0.0
  %78 = vmatpush1.msra.mxu0 0.0
  %79 = vmatprep.subr.mxu0 0.0
  %80 = vmatpush1.msra.mxu0 0.0
  %81 = vmatprep.subr.mxu0 0.0
  %82 = vmatpush1.msra.mxu0 0.0
  %83 = vmatprep.subr.mxu0 0.0
  %84 = vmatpush1.msra.mxu0 0.0
  %85 = vmatprep.subr.mxu0 0.0
  %86 = vmatpush1.msra.mxu0 0.0
  %87 = vmatprep.subr.mxu0 0.0
  %88 = vmatpush1.msra.mxu0 0.0
  %89 = vmatprep.subr.mxu0 0.0
  %90 = vmatpush1.msra.mxu0 0.0
  %91 = vmatprep.subr.mxu0 0.0
  %92 = vmatpush1.msra.mxu0 0.0
  %93 = vmatprep.subr.mxu0 0.0
  %94 = vmatpush1.msra.mxu0 0.0
  %95 = vmatprep.subr.mxu0 0.0
  %96 = vmatpush1.msra.mxu0 0.0
  %97 = vmatprep.subr.mxu0 0.0
  %98 = vmatpush1.msra.mxu0 0.0
  %99 = vmatprep.subr.mxu0 0.0
  %100 = vmatpush1.msra.mxu0 0.0
  %101 = vmatprep.subr.mxu0 0.0
  %102 = vmatpush1.msra.mxu0 0.0
  %103 = vmatprep.subr.mxu0 0.0
  %104 = vmatpush1.msra.mxu0 0.0
  %105 = vmatprep.subr.mxu0 0.0
  %106 = vmatpush1.msra.mxu0 0.0
  %107 = vmatprep.subr.mxu0 0.0
  %108 = vmatpush1.msra.mxu0 0.0
  %109 = vmatprep.subr.mxu0 0.0
  %110 = vmatpush1.msra.mxu0 0.0
  %111 = vmatprep.subr.mxu0 0.0
  %112 = vmatpush1.msra.mxu0 0.0
  %113 = vmatprep.subr.mxu0 0.0
  %114 = vmatpush1.msra.mxu0 0.0
  %115 = vmatprep.subr.mxu0 0.0
  %116 = vmatpush1.msra.mxu0 0.0
  %117 = vmatprep.subr.mxu0 0.0
  %118 = vmatpush1.msra.mxu0 0.0
  %119 = vmatprep.subr.mxu0 0.0
  %120 = vmatpush1.msra.mxu0 0.0
  %121 = vmatprep.subr.mxu0 0.0
  %122 = vmatpush1.msra.mxu0 0.0
  %123 = vmatprep.mubr.f32.mxu0 0.0
  %124 = vmatmul.mubr.f32.gmra.mrb[0].mxu0 %v48
  %v125 = vpop.f32.mrb[0].mxu0
  %v126 = vadd.f32 %v29, %v125
  %v127 = vpop.f32.mrb[0].mxu0
  %128 = vmatprep.mubr.f32.mxu0 0.0
  %129 = vmatmul.mubr.f32.gmra.mrb[0].mxu0 %v51
  %v130 = vpop.f32.mrb[0].mxu0
  %v131 = vadd.f32 %v34, %v130
  %v132 = vpop.f32.mrb[0].mxu0
  %133 = vmatprep.mubr.f32.mxu0 0.0
  %134 = vmatmul.mubr.f32.gmra.mrb[0].mxu0 %v54
  %v135 = vpop.f32.mrb[0].mxu0
  %v136 = vadd.f32 %v39, %v135
  %v137 = vpop.f32.mrb[0].mxu0
  %138 = vmatprep.mubr.f32.mxu0 0.0
  %139 = vmatmul.mubr.f32.gmra.mrb[0].mxu0 %v57
  %v140 = vpop.f32.mrb[0].mxu0
  %v141 = vadd.f32 %v44, %v140
  %v142 = vpop.f32.mrb[0].mxu0
  %143 = vdwg.mxu0
  %v144 = vmax.f32 %v126, 0.0
  %v145 = vmax.f32 %v131, 0.0
  %v146 = vmax.f32 %v136, 0.0
  %v147 = vmax.f32 %v141, 0.0
  %vm148 = vcmask 130048
  %149 = vst.msk [vmem:[%s3] sm:$0xff] %vm148, %v144
  %150 = vst.msk [vmem:[%s3 + $0x8] sm:$0xff] %vm148, %v145
  %151 = vst.msk [vmem:[%s3 + $0x10] sm:$0xff] %vm148, %v146
  %152 = vst.msk [vmem:[%s3 + $0x18] sm:$0xff] %vm148, %v147
  // Predicated region
  $region14: #{tpu_custom_call.1} parent=0 // pred_check
    _
  $region15: #{tpu_custom_call.1} parent=0 // pred_check_branch
    %154 = sbr.rel (0) target = $region17
  $region16: #{tpu_custom_call.1} parent=0 // pred_region
    _
  $region17: #{tpu_custom_call.1} parent=0 // pred_fallthru
    _
  // Predicated region
  $region18: #{tpu_custom_call.1} parent=0 // pred_check
    _
  $region19: #{tpu_custom_call.1} parent=0 // pred_check_branch
    %156 = sbr.rel (0) target = $region21
  $region20: #{tpu_custom_call.1} parent=0 // pred_region
    _
  $region21: #{tpu_custom_call.1} parent=0 // pred_fallthru
    _

</llo_original>
